<compile_context>
chip_gen: v5e
topology: v5e:2x2
jax: 0.10.0
libtpu: 0.0.40
codegen_flags: <defaults>
</compile_context>

<pallas_src>
import jax
import jax.numpy as jnp
from jax.experimental import pallas as pl
from jax.experimental.pallas import tpu as pltpu


def _learned_constant_kernel(const_ref, out_ref):
    # const_ref: (1, tf) VMEM tile -- same block index along the batch grid
    #            axis, so Pallas does not re-fetch it for successive steps.
    # out_ref:   (tb, tf) VMEM tile for one (batch-rows, lane-columns) chunk.
    out_ref[...] = jnp.broadcast_to(const_ref[...], out_ref.shape)


def learned_constant_forward(
    constant,
    batch_size,
    *,
    target_block_bytes=8 << 20,   # good for v6e/v7x; still fine on v5e
    min_pallas_bytes=1 << 20,
    force_pallas=False,
):
    """Repeat `constant` (1, C, R, R) along the batch dim -> (N, C, R, R)."""
    one, C, R, R2 = constant.shape
    assert one == 1 and R == R2
    dtype = constant.dtype
    itemsize = jnp.dtype(dtype).itemsize

    F = C * R * R2
    total_bytes = batch_size * F * itemsize

    # ---- Tiny outputs: skip Pallas, let XLA fuse the broadcast downstream.
    if not force_pallas and total_bytes < min_pallas_bytes:
        return jnp.broadcast_to(constant, (batch_size, C, R, R2))

    # ---- Lane-dense (N, F) slab, no padding / no post-slice.
    const_flat = constant.reshape(1, F)
    row_bytes = F * itemsize
    # Sublane multiple for the 2nd-to-last block dim: f32->8, bf16->16, int8->32.
    sublane_mult = max(8, 32 // itemsize)

    # ---- Column tiling only when a minimal row group would blow the budget.
    if sublane_mult * row_bytes > target_block_bytes and F > 128:
        tf = max(128, (target_block_bytes // (sublane_mult * itemsize)) // 128 * 128)
        tb = batch_size if batch_size <= sublane_mult else sublane_mult
    else:
        tf = F
        tb = max(1, target_block_bytes // row_bytes)
        if tb >= batch_size:
            tb = batch_size                      # full-dim block: always legal
        else:
            tb = max(sublane_mult, (tb // sublane_mult) * sublane_mult)

    grid_b = pl.cdiv(batch_size, tb)
    grid_f = pl.cdiv(F, tf)

    # ---- Megacore: ensure >= 2 "parallel" batch steps when it pays off, so
    # both TensorCores (v7x) split the HBM write.
    if (grid_b == 1 and grid_f == 1 and total_bytes >= (4 << 20)
            and batch_size >= 2 * sublane_mult):
        half = -(-batch_size // 2)
        tb = ((half + sublane_mult - 1) // sublane_mult) * sublane_mult
        grid_b = pl.cdiv(batch_size, tb)

    out_block_bytes = tb * tf * itemsize
    in_block_bytes = tf * itemsize
    # Double-buffered output + (conservatively) double-buffered constant + slack.
    vmem_limit = 2 * out_block_bytes + 2 * in_block_bytes + (1 << 20)
    vmem_limit = int(min(max(vmem_limit, 2 << 20), 48 << 20))

    bytes_accessed = total_bytes + row_bytes     # write the slab + read the constant

    out_flat = pl.pallas_call(
        _learned_constant_kernel,
        out_shape=jax.ShapeDtypeStruct((batch_size, F), dtype),
        grid_spec=pltpu.PrefetchScalarGridSpec(
            num_scalar_prefetch=0,
            grid=(grid_b, grid_f),
            in_specs=[
                # Same block index along the batch axis -> constant not re-DMA'd.
                pl.BlockSpec((1, tf), lambda b, f: (0, f)),
            ],
            out_specs=pl.BlockSpec((tb, tf), lambda b, f: (b, f)),
        ),
        compiler_params=pltpu.CompilerParams(
            dimension_semantics=("parallel", "parallel"),
            vmem_limit_bytes=vmem_limit,
        ),
        cost_estimate=pl.CostEstimate(
            flops=0, transcendentals=0, bytes_accessed=int(bytes_accessed)
        ),
    )(const_flat)

    return out_flat.reshape(batch_size, C, R, R2)


class LearnedConstant:
    """JAX port of the PyTorch LearnedConstant module."""

    def __init__(self, num_channels, resolution, dtype=jnp.float32):
        # Deterministic init, matching torch.ones(1, C, R, R).
        self.constant = jnp.ones((1, num_channels, resolution, resolution), dtype=dtype)

    def __call__(self, inputs, *, force_pallas=False):
        return learned_constant_forward(
            self.constant, inputs.shape[0], force_pallas=force_pallas
        )


if __name__ == "__main__":
    key = jax.random.PRNGKey(0)

    batch, num_channels, resolution = 2, 4, 16
    # `inputs` is only consulted for its batch dimension, just like in PyTorch.
    inputs = jax.random.normal(
        key, (batch, num_channels, resolution, resolution), dtype=jnp.float32
    )

    module = LearnedConstant(num_channels, resolution)
    ref = jnp.broadcast_to(
        module.constant, (batch, num_channels, resolution, resolution)
    )

    # Default path: tiny output -> XLA broadcast fallback (fused, no launch cost).
    out = jax.block_until_ready(module(inputs))
    assert out.shape == ref.shape and out.dtype == module.constant.dtype
    assert bool(jnp.array_equal(out, ref))

    # Force the Pallas kernel on the same small shape (F = 1024, lane-dense).
    out_p = jax.block_until_ready(module(inputs, force_pallas=True))
    assert bool(jnp.array_equal(out_p, ref))

    # Exercise the no-pad path (F = 75, not a multiple of 128 -> masked tail
    # stores) plus a multi-step grid with a partial last batch block.
    const2 = jnp.ones((1, 3, 5, 5), dtype=jnp.float32)
    out2 = jax.block_until_ready(
        learned_constant_forward(
            const2, 20, target_block_bytes=4096, force_pallas=True
        )
    )
    ref2 = jnp.broadcast_to(const2, (20, 3, 5, 5))
    assert bool(jnp.array_equal(out2, ref2))

    print("KERNEL_OK")
</pallas_src>

<mosaic_0001>
module attributes {stable_mosaic.version = 11 : i64} {
  func.func @_learned_constant_kernel(%arg0: i32, %arg1: i32, %arg2: memref<1x1024xf32, #tpu.memory_space<vmem>>, %arg3: memref<2x1024xf32, #tpu.memory_space<vmem>>) attributes {dimension_semantics = [#tpu.dimension_semantics<parallel>, #tpu.dimension_semantics<parallel>], iteration_bounds = array<i64: 1, 1>, scalar_prefetch = 0 : i64, scratch_operands = 0 : i64, tpu.core_type = #tpu.core_type<tc>, window_params = [{transform_indices = @transform_0, window_bounds = array<i64: 1, 1024>}, {transform_indices = @transform_1, window_bounds = array<i64: 2, 1024>}]} {
    %c0 = arith.constant 0 : index
    %c0_0 = arith.constant 0 : index
    %0 = vector.load %arg2[%c0, %c0_0] : memref<1x1024xf32, #tpu.memory_space<vmem>>, vector<1x1024xf32>
    %1 = vector.shape_cast %0 : vector<1x1024xf32> to vector<1x1024xf32>
    %2 = vector.broadcast %1 : vector<1x1024xf32> to vector<2x1024xf32>
    %c0_1 = arith.constant 0 : index
    %c0_2 = arith.constant 0 : index
    %3 = vector.load %arg3[%c0_1, %c0_2] : memref<2x1024xf32, #tpu.memory_space<vmem>>, vector<2x1024xf32>
    tpu.vector_store %arg3[%c0_1, %c0_2], %2 {strides = array<i32>} : memref<2x1024xf32, #tpu.memory_space<vmem>>, vector<2x1024xf32>,
    return
  }
  func.func @transform_0(%arg0: i32, %arg1: i32) -> (i32, i32) {
    %c0_i32 = arith.constant 0 : i32
    %c0_i32_0 = arith.constant 0 : i32
    return %c0_i32, %arg1 : i32, i32
  }
  func.func @transform_1(%arg0: i32, %arg1: i32) -> (i32, i32) {
    %c0_i32 = arith.constant 0 : i32
    return %arg0, %arg1 : i32, i32
  }
}

</mosaic_0001>

<llo_original>
// kernel: tpu_custom_call.1
$region0: #{tpu_custom_call.1}
  #allocation0 [shape = 'u32[]', space=smem, size = 0x4, offset = 0x4, fixed_abs, tag = 'smem constant byte address 0x4 - core index']
  #allocation1 [shape = 'u32[72,128]{1,0:T(1,128)}', space=vmem, size = 0x9000, scoped, tag = 'internal scratch']
  %s0 = inlined_call_operand.hbm [shape: f32[1,1024], index: 0, kind: input, shape index: {}]
  %s1 = inlined_call_operand.hbm [shape: f32[2,1024], index: 1, kind: output, shape index: {}]
  %s2 = sld [smem:[#allocation0]]
  $region18: #{tpu_custom_call.1} parent=0
    _
  %s4 = ssub.s32 1, %s2
  %s5 = scalar_select 0, %s4, %s2
  $region1: #{tpu_custom_call.1} parent=0
    #allocation2 [shape = 'u8[4096]{0}', space=vmem, size = 0x1000, scoped, tag = 'input window, operand 0, single buffered']
    #allocation3 [shape = 's32[1]{0}', space=sflag, size = 0x4, scoped, tag = 'scoped memory for tpu_custom_call.1']
    #allocation4 [shape = 's32[1]{0}', space=sflag, size = 0x4, scoped, tag = 'scoped memory for tpu_custom_call.1']
    #allocation5 [shape = 'u8[8192]{0}', space=vmem, size = 0x2000, scoped, tag = 'output window, operand 0, single buffered']
    %6 = vsyncpa [#allocation3], 0
    %7 = vsyncpa [#allocation4], 0
    // Predicated region
    $region2: #{tpu_custom_call.1} parent=1 // pred_check
      _
    $region3: #{tpu_custom_call.1} parent=1 // pred_check_branch
      %9 = sbr.rel (0) target = $region5
    $region4: #{tpu_custom_call.1} parent=1 // pred_region
      %11 = vsyncadd [#allocation3], 0
      %s13 = sshll.u32 %s0, 4
      %s14 = int_to_ptr.hbm [resolvable:$true] %s13
      %s15 = sshll.u32 [#allocation2], 4
      %s16 = int_to_ptr.vmem [resolvable:$true] %s15
      %18 = dma.hbm_to_vmem [thread:$0]  %s14, 128, %s16, [#allocation3]
    $region5: #{tpu_custom_call.1} parent=1 // pred_fallthru
      _
    // Predicated region
    $region6: #{tpu_custom_call.1} parent=1 // pred_check
      _
    $region7: #{tpu_custom_call.1} parent=1 // pred_check_branch
      %20 = sbr.rel (0) target = $region9
    $region8: #{tpu_custom_call.1} parent=1 // pred_region
      %22 = dma.done [#allocation3], 128
    $region9: #{tpu_custom_call.1} parent=1 // pred_fallthru
      _
    %v23 = vld [vmem:[#allocation2] sm:$0xff]
    %v25 = vperm.slane %v23, 0
    %v26 = vperm.slane %v23, 1
    %v27 = vperm.slane %v23, 2
    %v28 = vperm.slane %v23, 3
    %v29 = vperm.slane %v23, 4
    %v30 = vperm.slane %v23, 5
    %v31 = vperm.slane %v23, 6
    %v32 = vperm.slane %v23, 7
    %v33 = vrot.slane %v26, 6
    %v34 = vrot.slane %v27, 4
    %v35 = vrot.slane %v28, 2
    %v36 = vrot.slane %v30, 6
    %v37 = vrot.slane %v31, 4
    %v38 = vrot.slane %v32, 2
    %vm39 = vcmask 1041408
    %v40 = vsel %vm39, %v25, %v33
    %vm41 = vcmask 1045508
    %v42 = vsel %vm41, %v34, %v35
    %vm43 = vcmask 1043456
    %v44 = vsel %vm43, %v40, %v42
    %v45 = vsel %vm39, %v29, %v36
    %v46 = vsel %vm41, %v37, %v38
    %v47 = vsel %vm43, %v45, %v46
    %50 = vst [vmem:[#allocation5] sm:$0xff] %v44
    %51 = vst [vmem:[#allocation5 + $0x8] sm:$0xff] %v47
    // Predicated region
    $region10: #{tpu_custom_call.1} parent=1 // pred_check
      _
    $region11: #{tpu_custom_call.1} parent=1 // pred_check_branch
      %53 = sbr.rel (0) target = $region13
    $region12: #{tpu_custom_call.1} parent=1 // pred_region
      %55 = vsyncadd [#allocation4], 0
      %s57 = sshll.u32 [#allocation5], 4
      %s58 = int_to_ptr.vmem [resolvable:$true] %s57
      %s59 = sshll.u32 %s1, 4
      %s60 = int_to_ptr.hbm [resolvable:$true] %s59
      %62 = dma.vmem_to_hbm [thread:$0]  %s58, 256, %s60, [#allocation4]
    $region13: #{tpu_custom_call.1} parent=1 // pred_fallthru
      _
    // Predicated region
    $region14: #{tpu_custom_call.1} parent=1 // pred_check
      _
    $region15: #{tpu_custom_call.1} parent=1 // pred_check_branch
      %64 = sbr.rel (0) target = $region17
    $region16: #{tpu_custom_call.1} parent=1 // pred_region
      %66 = dma.done [#allocation4], 256
    $region17: #{tpu_custom_call.1} parent=1 // pred_fallthru
      _
    %67 = vsyncpa [#allocation3], 1
    %68 = vsyncpa [#allocation4], 1

</llo_original>
